<compile_context>
chip_gen: v6e
topology: v6e:2x2x1
jax: 0.10.0
libtpu: 0.0.40
codegen_flags: <defaults>
</compile_context>

<pallas_src>
import numpy as np
import jax
import jax.numpy as jnp
from jax import lax
from jax.experimental import pallas as pl
from jax.experimental.pallas import tpu as pltpu


def _eval_kernel(t_ref, c_ref, x_ref, out_ref):
    # t_ref: (16, N) ground-truth transform, row-major flattened, tiled per scale
    # c_ref: (16, N) coarse estimated transforms (flattened 4x4), N = S*B lanes
    # x_ref: (4,  N) RT4D estimates [r0, r1, tx, tz]
    # out_ref: (2, N) -> row 0 = RTE, row 1 = clipped cos_theta
    T = t_ref[...]
    C = c_ref[...]
    X = x_ref[...]

    def t(i, j):  # transform[:, i, j] -> (1, N) sublane-row slice
        return T[4 * i + j: 4 * i + j + 1, :]

    def c(i, j):  # coarse[:, i, j] -> (1, N)
        return C[4 * i + j: 4 * i + j + 1, :]

    # R_gt = transform[:, :3, :3] @ coarse[:, :3, :3]^T  (only rows 0 and 2 needed)
    Rg = {}
    for m in (0, 2):
        for k in range(3):
            Rg[(m, k)] = t(m, 0) * c(k, 0) + t(m, 1) * c(k, 1) + t(m, 2) * c(k, 2)

    # T_gt = transform[:, :3, 3] - (coarse[:, :3, 3][None] @ R_gt^T); components 0, 2
    Tg0 = t(0, 3) - (c(0, 3) * Rg[(0, 0)] + c(1, 3) * Rg[(0, 1)] + c(2, 3) * Rg[(0, 2)])
    Tg2 = t(2, 3) - (c(0, 3) * Rg[(2, 0)] + c(1, 3) * Rg[(2, 1)] + c(2, 3) * Rg[(2, 2)])

    # R6D_estimate = F.normalize(RT4D[:, :2], dim=-1) with eps 1e-12:
    # rsqrt(max(nsq, 1e-24)) == 1 / max(sqrt(nsq), 1e-12)   (exact EUP rsqrt)
    r0 = X[0:1, :]
    r1 = X[1:2, :]
    inv_norm = lax.rsqrt(jnp.maximum(r0 * r0 + r1 * r1, 1e-24))
    e0 = r0 * inv_norm
    e1 = r1 * inv_norm

    # cos_theta = dot([R_gt[:,2,0], R_gt[:,0,0]], R6D_estimate), clipped
    cos_theta = jnp.clip(Rg[(2, 0)] * e0 + Rg[(0, 0)] * e1, -1.0, 1.0)

    # RTE = || [T_gt[:,0], T_gt[:,2]] - RT4D[:, 2:] ||
    d0 = Tg0 - X[2:3, :]
    d1 = Tg2 - X[3:4, :]
    rte = jnp.sqrt(d0 * d0 + d1 * d1)

    out_ref[...] = jnp.concatenate([rte, cos_theta], axis=0)  # single (2, N) store


def eval_function(transform, coarse_list, rt4d_list):
    """transform: (B,4,4); coarse_list: S x (B,4,4); rt4d_list: S x (B,4)."""
    B = transform.shape[0]
    S = len(coarse_list)
    N = S * B

    # Lane-dense layout: lane index n = s*B + b, matrix element on sublane axis.
    tflat = jnp.tile(transform.reshape(B, 16).T.astype(jnp.float32), (1, S))      # (16, N)
    cflat = jnp.stack(coarse_list, 0).reshape(N, 16).T.astype(jnp.float32)        # (16, N)
    rt4d = jnp.stack(rt4d_list, 0).reshape(N, 4).T.astype(jnp.float32)            # (4, N)

    out = pl.pallas_call(
        _eval_kernel,
        out_shape=jax.ShapeDtypeStruct((2, N), jnp.float32),
        in_specs=[
            pl.BlockSpec(memory_space=pltpu.MemorySpace.VMEM),
            pl.BlockSpec(memory_space=pltpu.MemorySpace.VMEM),
            pl.BlockSpec(memory_space=pltpu.MemorySpec.VMEM)
            if False else pl.BlockSpec(memory_space=pltpu.MemorySpace.VMEM),
        ],
        out_specs=pl.BlockSpec(memory_space=pltpu.MemorySpace.VMEM),
    )(tflat, cflat, rt4d)

    rte = out[0].reshape(S, B)
    cos_theta = out[1].reshape(S, B)
    # arccos/degrees on a handful of scalars; Mosaic has no reliable acos lowering.
    rre = jnp.degrees(jnp.arccos(cos_theta))
    # TODO(synk): PnP-RANSAC branch (OpenCV solvePnPRansac) and file I/O of the
    # original forward have no Pallas equivalent and are omitted.
    return {"PIR": 0, "IR": 0, "RTE": rte, "RRE": rre}


def _reference(transform, coarse_list, rt4d_list):
    transform = np.asarray(transform, np.float32)
    rtes, rres = [], []
    for coarse, rt4d in zip(coarse_list, rt4d_list):
        coarse = np.asarray(coarse, np.float32)
        rt4d = np.asarray(rt4d, np.float32)
        R_gt = transform[:, :3, :3] @ np.swapaxes(coarse[:, :3, :3], -1, -2)
        T_trans = transform[:, :3, 3]
        T_gt = T_trans - np.squeeze(
            coarse[:, :3, 3][:, None, :] @ np.swapaxes(R_gt, -1, -2), axis=1)
        R_gt2 = np.stack([R_gt[:, 2, 0], R_gt[:, 0, 0]], axis=1)
        T_gt2 = np.stack([T_gt[:, 0], T_gt[:, 2]], axis=1)
        n = np.maximum(np.linalg.norm(rt4d[:, :2], axis=-1, keepdims=True), 1e-12)
        R6D = rt4d[:, :2] / n
        T_est = rt4d[:, 2:]
        cos_theta = np.clip(np.sum(R_gt2 * R6D, axis=1), -1.0, 1.0)
        rres.append(np.degrees(np.arccos(cos_theta)))
        rtes.append(np.linalg.norm(T_gt2 - T_est, axis=1))
    return np.stack(rtes), np.stack(rres)


if __name__ == "__main__":
    B, S = 8, 4
    key = jax.random.PRNGKey(0)
    k1, k2, k3 = jax.random.split(key, 3)
    transform = jax.random.normal(k1, (B, 4, 4), jnp.float32)
    coarse_list = [jax.random.normal(jax.random.fold_in(k2, s), (B, 4, 4), jnp.float32)
                   for s in range(S)]
    rt4d_list = [jax.random.normal(jax.random.fold_in(k3, s), (B, 4), jnp.float32)
                 for s in range(S)]

    out = eval_function(transform, coarse_list, rt4d_list)
    jax.block_until_ready(out)

    rte_ref, rre_ref = _reference(transform, coarse_list, rt4d_list)
    np.testing.assert_allclose(np.asarray(out["RTE"]), rte_ref, rtol=1e-4, atol=1e-4)
    np.testing.assert_allclose(np.asarray(out["RRE"]), rre_ref, rtol=1e-3, atol=1e-2)
    assert out["PIR"] == 0 and out["IR"] == 0
    print("KERNEL_OK")
</pallas_src>

<mosaic_0001>
module attributes {stable_mosaic.version = 11 : i64} {
  func.func @_eval_kernel(%arg0: memref<16x32xf32, #tpu.memory_space<vmem>>, %arg1: memref<16x32xf32, #tpu.memory_space<vmem>>, %arg2: memref<4x32xf32, #tpu.memory_space<vmem>>, %arg3: memref<2x32xf32, #tpu.memory_space<vmem>>) attributes {dimension_semantics = [], scalar_prefetch = 0 : i64, scratch_operands = 0 : i64, tpu.core_type = #tpu.core_type<tc>} {
    %c0 = arith.constant 0 : index
    %c0_0 = arith.constant 0 : index
    %0 = vector.load %arg0[%c0, %c0_0] : memref<16x32xf32, #tpu.memory_space<vmem>>, vector<16x32xf32>
    %c0_1 = arith.constant 0 : index
    %c0_2 = arith.constant 0 : index
    %1 = vector.load %arg1[%c0_1, %c0_2] : memref<16x32xf32, #tpu.memory_space<vmem>>, vector<16x32xf32>
    %c0_3 = arith.constant 0 : index
    %c0_4 = arith.constant 0 : index
    %2 = vector.load %arg2[%c0_3, %c0_4] : memref<4x32xf32, #tpu.memory_space<vmem>>, vector<4x32xf32>
    %3 = vector.extract_strided_slice %0 {offsets = [0, 0], sizes = [1, 32], strides = [1, 1]} : vector<16x32xf32> to vector<1x32xf32>
    %4 = vector.extract_strided_slice %1 {offsets = [0, 0], sizes = [1, 32], strides = [1, 1]} : vector<16x32xf32> to vector<1x32xf32>
    %5 = arith.mulf %3, %4 : vector<1x32xf32>
    %6 = vector.extract_strided_slice %0 {offsets = [1, 0], sizes = [1, 32], strides = [1, 1]} : vector<16x32xf32> to vector<1x32xf32>
    %7 = vector.extract_strided_slice %1 {offsets = [1, 0], sizes = [1, 32], strides = [1, 1]} : vector<16x32xf32> to vector<1x32xf32>
    %8 = arith.mulf %6, %7 : vector<1x32xf32>
    %9 = arith.addf %5, %8 : vector<1x32xf32>
    %10 = vector.extract_strided_slice %0 {offsets = [2, 0], sizes = [1, 32], strides = [1, 1]} : vector<16x32xf32> to vector<1x32xf32>
    %11 = vector.extract_strided_slice %1 {offsets = [2, 0], sizes = [1, 32], strides = [1, 1]} : vector<16x32xf32> to vector<1x32xf32>
    %12 = arith.mulf %10, %11 : vector<1x32xf32>
    %13 = arith.addf %9, %12 : vector<1x32xf32>
    %14 = vector.extract_strided_slice %0 {offsets = [0, 0], sizes = [1, 32], strides = [1, 1]} : vector<16x32xf32> to vector<1x32xf32>
    %15 = vector.extract_strided_slice %1 {offsets = [4, 0], sizes = [1, 32], strides = [1, 1]} : vector<16x32xf32> to vector<1x32xf32>
    %16 = arith.mulf %14, %15 : vector<1x32xf32>
    %17 = vector.extract_strided_slice %0 {offsets = [1, 0], sizes = [1, 32], strides = [1, 1]} : vector<16x32xf32> to vector<1x32xf32>
    %18 = vector.extract_strided_slice %1 {offsets = [5, 0], sizes = [1, 32], strides = [1, 1]} : vector<16x32xf32> to vector<1x32xf32>
    %19 = arith.mulf %17, %18 : vector<1x32xf32>
    %20 = arith.addf %16, %19 : vector<1x32xf32>
    %21 = vector.extract_strided_slice %0 {offsets = [2, 0], sizes = [1, 32], strides = [1, 1]} : vector<16x32xf32> to vector<1x32xf32>
    %22 = vector.extract_strided_slice %1 {offsets = [6, 0], sizes = [1, 32], strides = [1, 1]} : vector<16x32xf32> to vector<1x32xf32>
    %23 = arith.mulf %21, %22 : vector<1x32xf32>
    %24 = arith.addf %20, %23 : vector<1x32xf32>
    %25 = vector.extract_strided_slice %0 {offsets = [0, 0], sizes = [1, 32], strides = [1, 1]} : vector<16x32xf32> to vector<1x32xf32>
    %26 = vector.extract_strided_slice %1 {offsets = [8, 0], sizes = [1, 32], strides = [1, 1]} : vector<16x32xf32> to vector<1x32xf32>
    %27 = arith.mulf %25, %26 : vector<1x32xf32>
    %28 = vector.extract_strided_slice %0 {offsets = [1, 0], sizes = [1, 32], strides = [1, 1]} : vector<16x32xf32> to vector<1x32xf32>
    %29 = vector.extract_strided_slice %1 {offsets = [9, 0], sizes = [1, 32], strides = [1, 1]} : vector<16x32xf32> to vector<1x32xf32>
    %30 = arith.mulf %28, %29 : vector<1x32xf32>
    %31 = arith.addf %27, %30 : vector<1x32xf32>
    %32 = vector.extract_strided_slice %0 {offsets = [2, 0], sizes = [1, 32], strides = [1, 1]} : vector<16x32xf32> to vector<1x32xf32>
    %33 = vector.extract_strided_slice %1 {offsets = [10, 0], sizes = [1, 32], strides = [1, 1]} : vector<16x32xf32> to vector<1x32xf32>
    %34 = arith.mulf %32, %33 : vector<1x32xf32>
    %35 = arith.addf %31, %34 : vector<1x32xf32>
    %36 = vector.extract_strided_slice %0 {offsets = [8, 0], sizes = [1, 32], strides = [1, 1]} : vector<16x32xf32> to vector<1x32xf32>
    %37 = vector.extract_strided_slice %1 {offsets = [0, 0], sizes = [1, 32], strides = [1, 1]} : vector<16x32xf32> to vector<1x32xf32>
    %38 = arith.mulf %36, %37 : vector<1x32xf32>
    %39 = vector.extract_strided_slice %0 {offsets = [9, 0], sizes = [1, 32], strides = [1, 1]} : vector<16x32xf32> to vector<1x32xf32>
    %40 = vector.extract_strided_slice %1 {offsets = [1, 0], sizes = [1, 32], strides = [1, 1]} : vector<16x32xf32> to vector<1x32xf32>
    %41 = arith.mulf %39, %40 : vector<1x32xf32>
    %42 = arith.addf %38, %41 : vector<1x32xf32>
    %43 = vector.extract_strided_slice %0 {offsets = [10, 0], sizes = [1, 32], strides = [1, 1]} : vector<16x32xf32> to vector<1x32xf32>
    %44 = vector.extract_strided_slice %1 {offsets = [2, 0], sizes = [1, 32], strides = [1, 1]} : vector<16x32xf32> to vector<1x32xf32>
    %45 = arith.mulf %43, %44 : vector<1x32xf32>
    %46 = arith.addf %42, %45 : vector<1x32xf32>
    %47 = vector.extract_strided_slice %0 {offsets = [8, 0], sizes = [1, 32], strides = [1, 1]} : vector<16x32xf32> to vector<1x32xf32>
    %48 = vector.extract_strided_slice %1 {offsets = [4, 0], sizes = [1, 32], strides = [1, 1]} : vector<16x32xf32> to vector<1x32xf32>
    %49 = arith.mulf %47, %48 : vector<1x32xf32>
    %50 = vector.extract_strided_slice %0 {offsets = [9, 0], sizes = [1, 32], strides = [1, 1]} : vector<16x32xf32> to vector<1x32xf32>
    %51 = vector.extract_strided_slice %1 {offsets = [5, 0], sizes = [1, 32], strides = [1, 1]} : vector<16x32xf32> to vector<1x32xf32>
    %52 = arith.mulf %50, %51 : vector<1x32xf32>
    %53 = arith.addf %49, %52 : vector<1x32xf32>
    %54 = vector.extract_strided_slice %0 {offsets = [10, 0], sizes = [1, 32], strides = [1, 1]} : vector<16x32xf32> to vector<1x32xf32>
    %55 = vector.extract_strided_slice %1 {offsets = [6, 0], sizes = [1, 32], strides = [1, 1]} : vector<16x32xf32> to vector<1x32xf32>
    %56 = arith.mulf %54, %55 : vector<1x32xf32>
    %57 = arith.addf %53, %56 : vector<1x32xf32>
    %58 = vector.extract_strided_slice %0 {offsets = [8, 0], sizes = [1, 32], strides = [1, 1]} : vector<16x32xf32> to vector<1x32xf32>
    %59 = vector.extract_strided_slice %1 {offsets = [8, 0], sizes = [1, 32], strides = [1, 1]} : vector<16x32xf32> to vector<1x32xf32>
    %60 = arith.mulf %58, %59 : vector<1x32xf32>
    %61 = vector.extract_strided_slice %0 {offsets = [9, 0], sizes = [1, 32], strides = [1, 1]} : vector<16x32xf32> to vector<1x32xf32>
    %62 = vector.extract_strided_slice %1 {offsets = [9, 0], sizes = [1, 32], strides = [1, 1]} : vector<16x32xf32> to vector<1x32xf32>
    %63 = arith.mulf %61, %62 : vector<1x32xf32>
    %64 = arith.addf %60, %63 : vector<1x32xf32>
    %65 = vector.extract_strided_slice %0 {offsets = [10, 0], sizes = [1, 32], strides = [1, 1]} : vector<16x32xf32> to vector<1x32xf32>
    %66 = vector.extract_strided_slice %1 {offsets = [10, 0], sizes = [1, 32], strides = [1, 1]} : vector<16x32xf32> to vector<1x32xf32>
    %67 = arith.mulf %65, %66 : vector<1x32xf32>
    %68 = arith.addf %64, %67 : vector<1x32xf32>
    %69 = vector.extract_strided_slice %0 {offsets = [3, 0], sizes = [1, 32], strides = [1, 1]} : vector<16x32xf32> to vector<1x32xf32>
    %70 = vector.extract_strided_slice %1 {offsets = [3, 0], sizes = [1, 32], strides = [1, 1]} : vector<16x32xf32> to vector<1x32xf32>
    %71 = arith.mulf %70, %13 : vector<1x32xf32>
    %72 = vector.extract_strided_slice %1 {offsets = [7, 0], sizes = [1, 32], strides = [1, 1]} : vector<16x32xf32> to vector<1x32xf32>
    %73 = arith.mulf %72, %24 : vector<1x32xf32>
    %74 = arith.addf %71, %73 : vector<1x32xf32>
    %75 = vector.extract_strided_slice %1 {offsets = [11, 0], sizes = [1, 32], strides = [1, 1]} : vector<16x32xf32> to vector<1x32xf32>
    %76 = arith.mulf %75, %35 : vector<1x32xf32>
    %77 = arith.addf %74, %76 : vector<1x32xf32>
    %78 = arith.subf %69, %77 : vector<1x32xf32>
    %79 = vector.extract_strided_slice %0 {offsets = [11, 0], sizes = [1, 32], strides = [1, 1]} : vector<16x32xf32> to vector<1x32xf32>
    %80 = vector.extract_strided_slice %1 {offsets = [3, 0], sizes = [1, 32], strides = [1, 1]} : vector<16x32xf32> to vector<1x32xf32>
    %81 = arith.mulf %80, %46 : vector<1x32xf32>
    %82 = vector.extract_strided_slice %1 {offsets = [7, 0], sizes = [1, 32], strides = [1, 1]} : vector<16x32xf32> to vector<1x32xf32>
    %83 = arith.mulf %82, %57 : vector<1x32xf32>
    %84 = arith.addf %81, %83 : vector<1x32xf32>
    %85 = vector.extract_strided_slice %1 {offsets = [11, 0], sizes = [1, 32], strides = [1, 1]} : vector<16x32xf32> to vector<1x32xf32>
    %86 = arith.mulf %85, %68 : vector<1x32xf32>
    %87 = arith.addf %84, %86 : vector<1x32xf32>
    %88 = arith.subf %79, %87 : vector<1x32xf32>
    %89 = vector.extract_strided_slice %2 {offsets = [0, 0], sizes = [1, 32], strides = [1, 1]} : vector<4x32xf32> to vector<1x32xf32>
    %90 = vector.extract_strided_slice %2 {offsets = [1, 0], sizes = [1, 32], strides = [1, 1]} : vector<4x32xf32> to vector<1x32xf32>
    %91 = arith.mulf %89, %89 : vector<1x32xf32>
    %92 = arith.mulf %90, %90 : vector<1x32xf32>
    %93 = arith.addf %91, %92 : vector<1x32xf32>
    %cst = arith.constant 1.000000e-24 : f32
    %94 = vector.broadcast %cst : f32 to vector<1x32xf32>
    %95 = arith.maximumf %93, %94 : vector<1x32xf32>
    %96 = math.rsqrt %95 : vector<1x32xf32>
    %97 = arith.mulf %89, %96 : vector<1x32xf32>
    %98 = arith.mulf %90, %96 : vector<1x32xf32>
    %99 = arith.mulf %46, %97 : vector<1x32xf32>
    %100 = arith.mulf %13, %98 : vector<1x32xf32>
    %101 = arith.addf %99, %100 : vector<1x32xf32>
    %cst_5 = arith.constant -1.000000e+00 : f32
    %cst_6 = arith.constant 1.000000e+00 : f32
    %102 = vector.broadcast %cst_5 : f32 to vector<1x32xf32>
    %103 = arith.maximumf %102, %101 : vector<1x32xf32>
    %104 = vector.broadcast %cst_6 : f32 to vector<1x32xf32>
    %105 = arith.minimumf %104, %103 : vector<1x32xf32>
    %106 = vector.extract_strided_slice %2 {offsets = [2, 0], sizes = [1, 32], strides = [1, 1]} : vector<4x32xf32> to vector<1x32xf32>
    %107 = arith.subf %78, %106 : vector<1x32xf32>
    %108 = vector.extract_strided_slice %2 {offsets = [3, 0], sizes = [1, 32], strides = [1, 1]} : vector<4x32xf32> to vector<1x32xf32>
    %109 = arith.subf %88, %108 : vector<1x32xf32>
    %110 = arith.mulf %107, %107 : vector<1x32xf32>
    %111 = arith.mulf %109, %109 : vector<1x32xf32>
    %112 = arith.addf %110, %111 : vector<1x32xf32>
    %113 = math.sqrt %112 : vector<1x32xf32>
    %114 = tpu.concatenate %113, %105 in 0 : vector<1x32xf32>, vector<1x32xf32> -> vector<2x32xf32>
    %c0_7 = arith.constant 0 : index
    %c0_8 = arith.constant 0 : index
    %115 = vector.load %arg3[%c0_7, %c0_8] : memref<2x32xf32, #tpu.memory_space<vmem>>, vector<2x32xf32>
    tpu.vector_store %arg3[%c0_7, %c0_8], %114 {strides = array<i32>} : memref<2x32xf32, #tpu.memory_space<vmem>>, vector<2x32xf32>,
    return
  }
}

</mosaic_0001>

<llo_original>
// kernel: tpu_custom_call.1
$region0: #{tpu_custom_call.1}
  #allocation0 [shape = 'u32[]', space=smem, size = 0x4, offset = 0x4, fixed_abs, tag = 'smem constant byte address 0x4 - core index']
  #allocation1 [shape = 'u32[144,128]{1,0:T(1,128)}', space=vmem, size = 0x12000, scoped, tag = 'internal scratch']
  %s0 = inlined_call_operand.hbm [shape: f32[16,32], index: 0, kind: input, shape index: {}]
  %s1 = inlined_call_operand.hbm [shape: f32[16,32], index: 1, kind: input, shape index: {}]
  %s2 = inlined_call_operand.hbm [shape: f32[4,32], index: 2, kind: input, shape index: {}]
  %s3 = inlined_call_operand.hbm [shape: f32[2,32], index: 3, kind: output, shape index: {}]
  %s4 = sld [smem:[#allocation0]]
  $region34: #{tpu_custom_call.1} parent=0
    _
  %s6 = ssub.s32 1, %s4
  %s7 = scalar_select 0, %s6, %s4
  $region1: #{tpu_custom_call.1} parent=0
    #allocation2 [shape = 'u8[8192]{0}', space=vmem, size = 0x2000, scoped, tag = 'input window, operand 0, single buffered']
    #allocation3 [shape = 's32[1]{0}', space=sflag, size = 0x4, scoped, tag = 'scoped memory for tpu_custom_call.1']
    #allocation4 [shape = 's32[1]{0}', space=sflag, size = 0x4, scoped, tag = 'scoped memory for tpu_custom_call.1']
    #allocation5 [shape = 'u8[8192]{0}', space=vmem, size = 0x2000, scoped, tag = 'input window, operand 1, single buffered']
    #allocation6 [shape = 's32[1]{0}', space=sflag, size = 0x4, scoped, tag = 'scoped memory for tpu_custom_call.1']
    #allocation7 [shape = 'u8[2048]{0}', space=vmem, size = 0x800, scoped, tag = 'input window, operand 2, single buffered']
    #allocation8 [shape = 'u8[1024]{0}', space=vmem, size = 0x400, scoped, tag = 'output window, operand 0, single buffered']
    %8 = vsyncpa [#allocation3], 0
    %9 = vsyncpa [#allocation6], 0
    %10 = vsyncpa [#allocation4], 0
    // Predicated region
    $region2: #{tpu_custom_call.1} parent=1 // pred_check
      _
    $region3: #{tpu_custom_call.1} parent=1 // pred_check_branch
      %12 = sbr.rel (0) target = $region5
    $region4: #{tpu_custom_call.1} parent=1 // pred_region
      %s14 = ssub.s32 256, 256
      %15 = vsyncadd [#allocation3], %s14
      %s16 = sshll.u32 [#allocation2], 4
      %s17 = int_to_ptr.vmem [resolvable:$true] %s16
      %22 = dma.hbm_to_vmem [thread:$0]  %s0, 256, %s17, [#allocation3], 128, 128, 8
    $region5: #{tpu_custom_call.1} parent=1 // pred_fallthru
      _
    // Predicated region
    $region6: #{tpu_custom_call.1} parent=1 // pred_check
      _
    $region7: #{tpu_custom_call.1} parent=1 // pred_check_branch
      %24 = sbr.rel (0) target = $region9
    $region8: #{tpu_custom_call.1} parent=1 // pred_region
      %s26 = ssub.s32 256, 256
      %27 = vsyncadd [#allocation6], %s26
      %s28 = sshll.u32 [#allocation5], 4
      %s29 = int_to_ptr.vmem [resolvable:$true] %s28
      %34 = dma.hbm_to_vmem [thread:$0]  %s1, 256, %s29, [#allocation6], 128, 128, 8
    $region9: #{tpu_custom_call.1} parent=1 // pred_fallthru
      _
    // Predicated region
    $region10: #{tpu_custom_call.1} parent=1 // pred_check
      _
    $region11: #{tpu_custom_call.1} parent=1 // pred_check_branch
      %36 = sbr.rel (0) target = $region13
    $region12: #{tpu_custom_call.1} parent=1 // pred_region
      %s38 = ssub.s32 64, 64
      %39 = vsyncadd [#allocation6], %s38
      %s41 = sshll.u32 [#allocation7], 4
      %s42 = int_to_ptr.vmem [resolvable:$true] %s41
      %44 = dma.hbm_to_vmem [thread:$0]  %s2, 64, %s42, [#allocation6]
    $region13: #{tpu_custom_call.1} parent=1 // pred_fallthru
      _
    // Predicated region
    $region14: #{tpu_custom_call.1} parent=1 // pred_check
      _
    $region15: #{tpu_custom_call.1} parent=1 // pred_check_branch
      %46 = sbr.rel (0) target = $region17
    $region16: #{tpu_custom_call.1} parent=1 // pred_region
      %47 = dma.done [#allocation3], 256
    $region17: #{tpu_custom_call.1} parent=1 // pred_fallthru
      _
    // Predicated region
    $region18: #{tpu_custom_call.1} parent=1 // pred_check
      _
    $region19: #{tpu_custom_call.1} parent=1 // pred_check_branch
      %49 = sbr.rel (0) target = $region21
    $region20: #{tpu_custom_call.1} parent=1 // pred_region
      %50 = dma.done [#allocation6], 256
    $region21: #{tpu_custom_call.1} parent=1 // pred_fallthru
      _
    // Predicated region
    $region22: #{tpu_custom_call.1} parent=1 // pred_check
      _
    $region23: #{tpu_custom_call.1} parent=1 // pred_check_branch
      %52 = sbr.rel (0) target = $region25
    $region24: #{tpu_custom_call.1} parent=1 // pred_region
      %53 = dma.done [#allocation6], 64
    $region25: #{tpu_custom_call.1} parent=1 // pred_fallthru
      _
    %v54 = vld [vmem:[#allocation2] sm:$0xff]
    %v55 = vld [vmem:[#allocation2 + $0x8] sm:$0xff]
    %v56 = vld [vmem:[#allocation5] sm:$0xff]
    %v57 = vld [vmem:[#allocation5 + $0x8] sm:$0xff]
    %v58 = vld [vmem:[#allocation7] sm:$0xf]
    %v59 = vmul.f32 %v54, %v56
    %v61 = vrot.slane %v59, 1
    %v63 = vadd.f32 %v59, %v61
    %v64 = vrot.slane %v59, 2
    %v66 = vadd.f32 %v63, %v64
    %v68 = vrot.slane %v56, 4
    %v70 = vmul.f32 %v54, %v68
    %v72 = vrot.slane %v70, 1
    %v74 = vadd.f32 %v70, %v72
    %v75 = vrot.slane %v70, 2
    %v77 = vadd.f32 %v74, %v75
    %v78 = vmul.f32 %v54, %v57
    %v80 = vrot.slane %v78, 1
    %v82 = vadd.f32 %v78, %v80
    %v83 = vrot.slane %v78, 2
    %v85 = vadd.f32 %v82, %v83
    %v86 = vmul.f32 %v55, %v56
    %v88 = vrot.slane %v86, 1
    %v90 = vadd.f32 %v86, %v88
    %v91 = vrot.slane %v86, 2
    %v93 = vadd.f32 %v90, %v91
    %v94 = vmul.f32 %v55, %v68
    %v96 = vrot.slane %v94, 1
    %v98 = vadd.f32 %v94, %v96
    %v99 = vrot.slane %v94, 2
    %v101 = vadd.f32 %v98, %v99
    %v102 = vmul.f32 %v55, %v57
    %v104 = vrot.slane %v102, 1
    %v106 = vadd.f32 %v102, %v104
    %v107 = vrot.slane %v102, 2
    %v109 = vadd.f32 %v106, %v107
    %v111 = vrot.slane %v66, 5
    %v113 = vmul.f32 %v56, %v111
    %v115 = vrot.slane %v77, 1
    %v117 = vmul.f32 %v56, %v115
    %v119 = vrot.slane %v117, 4
    %v121 = vadd.f32 %v113, %v119
    %v123 = vrot.slane %v85, 5
    %v125 = vmul.f32 %v57, %v123
    %v126 = vadd.f32 %v121, %v125
    %v127 = vsub.f32 %v54, %v126
    %v129 = vrot.slane %v93, 5
    %v131 = vmul.f32 %v56, %v129
    %v133 = vrot.slane %v101, 1
    %v135 = vmul.f32 %v56, %v133
    %v137 = vrot.slane %v135, 4
    %v139 = vadd.f32 %v131, %v137
    %v141 = vrot.slane %v109, 5
    %v143 = vmul.f32 %v57, %v141
    %v144 = vadd.f32 %v139, %v143
    %v145 = vsub.f32 %v55, %v144
    %v146 = vmul.f32 %v58, %v58
    %v148 = vrot.slane %v146, 1
    %v150 = vadd.f32 %v146, %v148
    %v151 = vmax.f32 %v150, 1e-24
    %v152 = vrsqrt.pop %v151
    %v153 = vmul.f32 %v58, %v152
    %v155 = vrot.slane %v152, 7
    %v157 = vmul.f32 %v58, %v155
    %v158 = vmul.f32 %v93, %v153
    %v160 = vrot.slane %v157, 1
    %v162 = vmul.f32 %v66, %v160
    %v163 = vadd.f32 %v158, %v162
    %v164 = vmax.f32 %v163, -1.0
    %v165 = vmin.f32 %v164, 1.0
    %v167 = vrot.slane %v58, 7
    %v169 = vsub.f32 %v127, %v167
    %v170 = vsub.f32 %v145, %v58
    %v171 = vmul.f32 %v169, %v169
    %v172 = vmul.f32 %v170, %v170
    %v173 = vadd.f32 %v171, %v172
    %v174 = vrsqrt.pop %v173
    %v175 = vmul.f32 %v173, %v174
    %vm176 = vcmp.eq.f32.partialorder %v173, inf
    %v177 = vsel %vm176, %v173, %v175
    %vm178 = vcmp.eq.f32.partialorder %v173, 0.0
    %v179 = vand.u32 %v173, 2147483648
    %v180 = vsel %vm178, %v179, %v177
    %v182 = vrot.slane %v180, 3
    %v185 = vrot.slane %v165, 7
    %vm187 = vcmask 1040384
    %v188 = vsel %vm187, %v182, %v185
    %vm189 = vcmask 254976
    %190 = vst.msk [vmem:[#allocation8] sm:$0x3] %vm189, %v188
    // Predicated region
    $region26: #{tpu_custom_call.1} parent=1 // pred_check
      _
    $region27: #{tpu_custom_call.1} parent=1 // pred_check_branch
      %192 = sbr.rel (0) target = $region29
    $region28: #{tpu_custom_call.1} parent=1 // pred_region
      %s194 = ssub.s32 32, 32
      %195 = vsyncadd [#allocation4], %s194
      %s197 = sshll.u32 [#allocation8], 4
      %s198 = int_to_ptr.vmem [resolvable:$true] %s197
      %200 = dma.vmem_to_hbm [thread:$0]  %s198, 32, %s3, [#allocation4]
    $region29: #{tpu_custom_call.1} parent=1 // pred_fallthru
      _
    // Predicated region
    $region30: #{tpu_custom_call.1} parent=1 // pred_check
      _
    $region31: #{tpu_custom_call.1} parent=1 // pred_check_branch
      %202 = sbr.rel (0) target = $region33
    $region32: #{tpu_custom_call.1} parent=1 // pred_region
      %203 = dma.done [#allocation4], 32
    $region33: #{tpu_custom_call.1} parent=1 // pred_fallthru
      _
    %204 = vsyncpa [#allocation3], 1
    %205 = vsyncpa [#allocation6], 1
    %206 = vsyncpa [#allocation4], 1

</llo_original>
